<compile_context>
chip_gen: v5e
topology: v5e:2x2
jax: 0.10.0
libtpu: 0.0.40
codegen_flags: <defaults>
</compile_context>

<pallas_src>
import functools

import jax
import jax.numpy as jnp
from jax.experimental import pallas as pl
from jax.experimental.pallas import tpu as pltpu

BN_EPS = 1e-5
# Sized so f32 x/out tiles at Lt<=512 stay comfortably double-buffered on every
# generation (v7x has only 64 MiB physical VMEM); raise for v6e + Lt>=1024.
VMEM_LIMIT_BYTES = 32 * 1024 * 1024


def _pick_l_tile(length, target=512):
    """Largest L-tile <= target that divides `length` (multiple of 128 when
    tiling); falls back to the full length."""
    if length <= target:
        return length
    for cand in range(target, 0, -128):
        if length % cand == 0:
            return cand
    return length


def _shifted_taps(x_t, halo, lt_size):
    """Build the x[l-1] and x[l+1] taps for one (Cin, Lt) tile.

    halo: (Cin, 2) = [column just left of the tile, column just right of the
    tile] (zeros at the sequence boundary, matching Conv1d padding=1)."""
    left = halo[:, 0:1]                                        # (Cin, 1)
    right = halo[:, 1:2]                                       # (Cin, 1)
    if lt_size % 128 == 0:
        # Production path: lane rotation on the XLU + boundary-column select.
        lane = jax.lax.broadcasted_iota(jnp.int32, (1, lt_size), 1)
        x_lm1 = jnp.where(lane == 0, left,
                          pltpu.roll(x_t, shift=1, axis=1))
        x_lp1 = jnp.where(lane == lt_size - 1, right,
                          pltpu.roll(x_t, shift=lt_size - 1, axis=1))
    else:
        # Sub-128-lane tiles (toy shapes): cheap concatenate fallback.
        x_lm1 = jnp.concatenate([left, x_t[:, :lt_size - 1]], axis=1)
        x_lp1 = jnp.concatenate([x_t[:, 1:], right], axis=1)
    return x_lm1, x_lp1


def _conv3_tile(x_ref, halo_ref, w0_ref, w1_ref, w2_ref, lt_size, mxu_dtype):
    """kernel=3 / padding=1 conv on one tile as 3 accumulated matmuls."""
    x_t = x_ref[...].astype(mxu_dtype)                         # (Cin, Lt)
    halo = halo_ref[...].astype(mxu_dtype)                     # (Cin, 2)
    x_lm1, x_lp1 = _shifted_taps(x_t, halo, lt_size)
    conv = jnp.dot(w0_ref[...], x_lm1, preferred_element_type=jnp.float32)
    conv = conv + jnp.dot(w1_ref[...], x_t,
                          preferred_element_type=jnp.float32)
    conv = conv + jnp.dot(w2_ref[...], x_lp1,
                          preferred_element_type=jnp.float32)
    return conv, x_t                                           # conv is f32


def _conv_stats_kernel(x_ref, halo_ref, w0_ref, w1_ref, w2_ref, stats_ref,
                       *, lt_size, mxu_dtype):
    """Pass 1: per-(batch, tile) partial sum / sum-of-squares of conv3(x)."""
    conv, _ = _conv3_tile(x_ref, halo_ref, w0_ref, w1_ref, w2_ref,
                          lt_size, mxu_dtype)
    s = jnp.sum(conv, axis=1, keepdims=True)                   # (Cout, 1)
    sq = jnp.sum(conv * conv, axis=1, keepdims=True)           # (Cout, 1)
    stats_ref[...] = jnp.concatenate([s, sq], axis=1)          # (Cout, 2)


def _bn_relu_res_kernel(x_ref, halo_ref, w0_ref, w1_ref, w2_ref, wres_ref,
                        scale_ref, shift_ref, out_ref, *, lt_size, mxu_dtype):
    """Pass 2: conv3, folded BN scale/shift, ReLU, + 1x1-conv residual."""
    conv, x_t = _conv3_tile(x_ref, halo_ref, w0_ref, w1_ref, w2_ref,
                            lt_size, mxu_dtype)
    res = jnp.dot(wres_ref[...], x_t, preferred_element_type=jnp.float32)
    out = jnp.maximum(conv * scale_ref[...] + shift_ref[...], 0.0) + res
    out_ref[...] = out.astype(out_ref.dtype)


def _boundary_columns(x, lt_size, num_lt):
    """Tiny (N, n_tiles, Cin, 2) array of cross-tile neighbor columns."""
    n_batch, c_in, _ = x.shape
    if num_lt == 1:
        return jnp.zeros((n_batch, 1, c_in, 2), x.dtype)
    zero = jnp.zeros((n_batch, c_in, 1), x.dtype)
    last_cols = x[:, :, lt_size - 1::lt_size]                  # (N, Cin, num_lt)
    first_cols = x[:, :, lt_size::lt_size]                     # (N, Cin, num_lt-1)
    left = jnp.concatenate([zero, last_cols[:, :, :num_lt - 1]], axis=2)
    right = jnp.concatenate([first_cols, zero], axis=2)
    halos = jnp.stack([left, right], axis=-1)                  # (N, Cin, T, 2)
    return jnp.transpose(halos, (0, 2, 1, 3))                  # (N, T, Cin, 2)


def cnn_encoder_layer(x, w1, gamma, beta, w_res=None, *, l_tile=None,
                      mxu_dtype=None):
    """x: (N, Cin, L).  w1: (Cout, Cin, 3).  gamma/beta: (Cout,).
    w_res: (Cout, Cin, 1) residual 1x1 conv weight (None only valid when
    Cin == Cout -> identity residual).  mxu_dtype: matmul operand dtype
    (jnp.bfloat16 recommended in production; default = x.dtype).
    Returns (N, Cout, L)."""
    n_batch, c_in, length = x.shape
    c_out = w1.shape[0]
    if w_res is None:
        if c_in != c_out:
            raise ValueError("w_res is required when input_size != output_size")
        w_res_mat = jnp.eye(c_out, dtype=w1.dtype)
    else:
        w_res_mat = w_res.reshape(c_out, c_in)
    if mxu_dtype is None:
        mxu_dtype = x.dtype

    lt_size = _pick_l_tile(length) if l_tile is None else int(l_tile)
    if length % lt_size != 0:
        raise ValueError(f"l_tile={lt_size} must divide L={length}")
    num_lt = length // lt_size

    # --- host-side glue (tiny): weight taps, residual weight, halo columns ---
    w_taps = [w1[:, :, k].astype(mxu_dtype) for k in range(3)]   # 3 x (Cout,Cin)
    w_r = w_res_mat.astype(mxu_dtype)
    halos = _boundary_columns(x, lt_size, num_lt)                # (N,T,Cin,2)

    x_spec = pl.BlockSpec((None, c_in, lt_size), lambda nb, t: (nb, 0, t))
    halo_spec = pl.BlockSpec((None, None, c_in, 2),
                             lambda nb, t: (nb, t, 0, 0))

    def _const_spec(arr):
        nd = arr.ndim
        return pl.BlockSpec(arr.shape, lambda nb, t: (0,) * nd)

    cparams = pltpu.CompilerParams(
        dimension_semantics=("parallel", "parallel"),
        vmem_limit_bytes=VMEM_LIMIT_BYTES)

    # --- pass 1: partial per-channel conv statistics, fully parallel ---------
    stats_part = pl.pallas_call(
        functools.partial(_conv_stats_kernel, lt_size=lt_size,
                          mxu_dtype=mxu_dtype),
        out_shape=jax.ShapeDtypeStruct((n_batch, num_lt, c_out, 2),
                                       jnp.float32),
        grid=(n_batch, num_lt),
        in_specs=[x_spec, halo_spec] + [_const_spec(w) for w in w_taps],
        out_specs=pl.BlockSpec((None, None, c_out, 2),
                               lambda nb, t: (nb, t, 0, 0)),
        compiler_params=cparams,
    )(x, halos, *w_taps)

    # --- BN fold hoisted out of the kernel (plain JAX, O(Cout)) --------------
    stats = jnp.sum(stats_part, axis=(0, 1))                    # (Cout, 2)
    count = float(n_batch * length)
    mu = stats[:, 0] / count
    var = jnp.maximum(stats[:, 1] / count - mu * mu, 0.0)       # clamp >= 0
    inv_std = jax.lax.rsqrt(var + BN_EPS)
    scale = (gamma.astype(jnp.float32) * inv_std).reshape(c_out, 1)
    shift = (beta.astype(jnp.float32) - mu * gamma.astype(jnp.float32)
             * inv_std).reshape(c_out, 1)

    # --- pass 2: conv + folded BN + ReLU + residual, lane-dense stores -------
    out = pl.pallas_call(
        functools.partial(_bn_relu_res_kernel, lt_size=lt_size,
                          mxu_dtype=mxu_dtype),
        out_shape=jax.ShapeDtypeStruct((n_batch, c_out, length), x.dtype),
        grid=(n_batch, num_lt),
        in_specs=([x_spec, halo_spec] + [_const_spec(w) for w in w_taps]
                  + [_const_spec(w_r), _const_spec(scale),
                     _const_spec(shift)]),
        out_specs=pl.BlockSpec((None, c_out, lt_size),
                               lambda nb, t: (nb, 0, t)),
        compiler_params=cparams,
    )(x, halos, *w_taps, w_r, scale, shift)
    return out


def _reference(x, w1, gamma, beta, w_res):
    """Pure-JAX reference of the PyTorch forward (training-mode BN, p=0)."""
    n_batch, c_in, length = x.shape
    c_out = w1.shape[0]
    x_pad = jnp.pad(x, ((0, 0), (0, 0), (1, 1)))
    conv = jnp.zeros((n_batch, c_out, length), jnp.float32)
    for k in range(3):
        conv = conv + jnp.einsum("oc,ncl->nol", w1[:, :, k],
                                 x_pad[:, :, k:k + length])
    mu = conv.mean(axis=(0, 2), keepdims=True)
    var = ((conv - mu) ** 2).mean(axis=(0, 2), keepdims=True)
    bn = ((conv - mu) / jnp.sqrt(var + BN_EPS)
          * gamma[None, :, None] + beta[None, :, None])
    act = jnp.maximum(bn, 0.0)
    res = jnp.einsum("oc,ncl->nol", w_res.reshape(c_out, c_in), x)
    return act + res


def _run_case(n, c_in, c_out, length, l_tile, mxu_dtype, atol, rtol):
    key = jax.random.PRNGKey(0)
    k_x, k_w1, k_wres = jax.random.split(key, 3)

    x = jax.random.normal(k_x, (n, c_in, length), dtype=jnp.float32)

    # conv1: xavier_uniform_ init, shape (Cout, Cin, 3), bias=False.
    fan_in, fan_out = c_in * 3, c_out * 3
    limit = (6.0 / (fan_in + fan_out)) ** 0.5
    w1 = jax.random.uniform(k_w1, (c_out, c_in, 3), jnp.float32, -limit, limit)

    # BatchNorm1d default affine init: gamma=1, beta=0.
    gamma = jnp.ones((c_out,), jnp.float32)
    beta = jnp.zeros((c_out,), jnp.float32)

    # Residual 1x1 conv (exists because input_size != output_size), bias=False.
    bound = 1.0 / (c_in ** 0.5)
    w_res = jax.random.uniform(k_wres, (c_out, c_in, 1), jnp.float32,
                               -bound, bound)

    out = cnn_encoder_layer(x, w1, gamma, beta, w_res, l_tile=l_tile,
                            mxu_dtype=mxu_dtype)
    out = jax.block_until_ready(out)

    ref = _reference(x, w1, gamma, beta, w_res)
    assert out.shape == (n, c_out, length)
    err = float(jnp.max(jnp.abs(out.astype(jnp.float32) - ref)))
    assert jnp.allclose(out, ref, atol=atol, rtol=rtol), (
        f"mismatch vs reference (max abs err {err:.3e}) for "
        f"L={length}, l_tile={l_tile}, mxu_dtype={mxu_dtype}")


if __name__ == "__main__":
    # Case 1: toy shape (single L tile), exact f32 matmul path, tight check.
    _run_case(2, 4, 8, 16, None, jnp.float32, atol=1e-4, rtol=1e-4)
    # Case 2: multi-tile L with cross-tile halos, roll-based taps and bf16 MXU
    # operands (the production configuration), looser tolerance vs f32 ref.
    _run_case(2, 4, 8, 256, 128, jnp.bfloat16, atol=5e-2, rtol=5e-2)
    print("KERNEL_OK")
</pallas_src>

<mosaic_0001>
module attributes {stable_mosaic.version = 11 : i64} {
  func.func @_conv_stats_kernel(%arg0: i32, %arg1: i32, %arg2: memref<1x4x16xf32, #tpu.memory_space<vmem>>, %arg3: memref<1x1x4x2xf32, #tpu.memory_space<vmem>>, %arg4: memref<8x4xf32, #tpu.memory_space<vmem>>, %arg5: memref<8x4xf32, #tpu.memory_space<vmem>>, %arg6: memref<8x4xf32, #tpu.memory_space<vmem>>, %arg7: memref<1x1x8x2xf32, #tpu.memory_space<vmem>>) attributes {dimension_semantics = [#tpu.dimension_semantics<parallel>, #tpu.dimension_semantics<parallel>], iteration_bounds = array<i64: 2, 1>, scalar_prefetch = 0 : i64, scratch_operands = 0 : i64, tpu.core_type = #tpu.core_type<tc>, window_params = [{transform_indices = @transform_0, window_bounds = array<i64: 1, 4, 16>}, {transform_indices = @transform_1, window_bounds = array<i64: 1, 1, 4, 2>}, {pipeline_mode = #tpu.pipeline_mode<synchronous>, transform_indices = @transform_2, window_bounds = array<i64: 8, 4>}, {pipeline_mode = #tpu.pipeline_mode<synchronous>, transform_indices = @transform_3, window_bounds = array<i64: 8, 4>}, {pipeline_mode = #tpu.pipeline_mode<synchronous>, transform_indices = @transform_4, window_bounds = array<i64: 8, 4>}, {transform_indices = @transform_5, window_bounds = array<i64: 1, 1, 8, 2>}]} {
    %c0 = arith.constant 0 : index
    %c0_0 = arith.constant 0 : index
    %c0_1 = arith.constant 0 : index
    %0 = vector.load %arg2[%c0, %c0_0, %c0_1] : memref<1x4x16xf32, #tpu.memory_space<vmem>>, vector<1x4x16xf32>
    %1 = vector.shape_cast %0 : vector<1x4x16xf32> to vector<4x16xf32>
    %c0_2 = arith.constant 0 : index
    %c0_3 = arith.constant 0 : index
    %c0_4 = arith.constant 0 : index
    %c0_5 = arith.constant 0 : index
    %2 = vector.load %arg3[%c0_2, %c0_3, %c0_4, %c0_5] : memref<1x1x4x2xf32, #tpu.memory_space<vmem>>, vector<1x1x4x2xf32>
    %3 = vector.shape_cast %2 : vector<1x1x4x2xf32> to vector<4x2xf32>
    %4 = vector.extract_strided_slice %3 {offsets = [0, 0], sizes = [4, 1], strides = [1, 1]} : vector<4x2xf32> to vector<4x1xf32>
    %5 = vector.extract_strided_slice %3 {offsets = [0, 1], sizes = [4, 1], strides = [1, 1]} : vector<4x2xf32> to vector<4x1xf32>
    %6 = vector.extract_strided_slice %1 {offsets = [0, 0], sizes = [4, 15], strides = [1, 1]} : vector<4x16xf32> to vector<4x15xf32>
    %7 = tpu.concatenate %4, %6 in 1 : vector<4x1xf32>, vector<4x15xf32> -> vector<4x16xf32>
    %8 = vector.extract_strided_slice %1 {offsets = [0, 1], sizes = [4, 15], strides = [1, 1]} : vector<4x16xf32> to vector<4x15xf32>
    %9 = tpu.concatenate %8, %5 in 1 : vector<4x15xf32>, vector<4x1xf32> -> vector<4x16xf32>
    %c0_6 = arith.constant 0 : index
    %c0_7 = arith.constant 0 : index
    %10 = vector.load %arg4[%c0_6, %c0_7] : memref<8x4xf32, #tpu.memory_space<vmem>>, vector<8x4xf32>
    %cst = arith.constant dense<0.000000e+00> : vector<8x16xf32>
    %11 = tpu.matmul %10, %7, %cst {dimension_numbers = #tpu.dot_dimension_numbers<[1], [0], [0], [1], [0, 0, 1, 1], [], []>} : vector<8x4xf32>, vector<4x16xf32>, vector<8x16xf32> -> vector<8x16xf32>
    %c0_8 = arith.constant 0 : index
    %c0_9 = arith.constant 0 : index
    %12 = vector.load %arg5[%c0_8, %c0_9] : memref<8x4xf32, #tpu.memory_space<vmem>>, vector<8x4xf32>
    %cst_10 = arith.constant dense<0.000000e+00> : vector<8x16xf32>
    %13 = tpu.matmul %12, %1, %cst_10 {dimension_numbers = #tpu.dot_dimension_numbers<[1], [0], [0], [1], [0, 0, 1, 1], [], []>} : vector<8x4xf32>, vector<4x16xf32>, vector<8x16xf32> -> vector<8x16xf32>
    %14 = arith.addf %11, %13 : vector<8x16xf32>
    %c0_11 = arith.constant 0 : index
    %c0_12 = arith.constant 0 : index
    %15 = vector.load %arg6[%c0_11, %c0_12] : memref<8x4xf32, #tpu.memory_space<vmem>>, vector<8x4xf32>
    %cst_13 = arith.constant dense<0.000000e+00> : vector<8x16xf32>
    %16 = tpu.matmul %15, %9, %cst_13 {dimension_numbers = #tpu.dot_dimension_numbers<[1], [0], [0], [1], [0, 0, 1, 1], [], []>} : vector<8x4xf32>, vector<4x16xf32>, vector<8x16xf32> -> vector<8x16xf32>
    %17 = arith.addf %14, %16 : vector<8x16xf32>
    %cst_14 = arith.constant dense<0.000000e+00> : vector<8xf32>
    %18 = vector.multi_reduction <add>, %17, %cst_14 [1] : vector<8x16xf32> to vector<8xf32>
    %19 = vector.shape_cast %18 : vector<8xf32> to vector<8x1xf32>
    %20 = arith.mulf %17, %17 : vector<8x16xf32>
    %cst_15 = arith.constant dense<0.000000e+00> : vector<8xf32>
    %21 = vector.multi_reduction <add>, %20, %cst_15 [1] : vector<8x16xf32> to vector<8xf32>
    %22 = vector.shape_cast %21 : vector<8xf32> to vector<8x1xf32>
    %23 = tpu.concatenate %19, %22 in 1 : vector<8x1xf32>, vector<8x1xf32> -> vector<8x2xf32>
    %c0_16 = arith.constant 0 : index
    %c0_17 = arith.constant 0 : index
    %c0_18 = arith.constant 0 : index
    %c0_19 = arith.constant 0 : index
    %24 = vector.load %arg7[%c0_16, %c0_17, %c0_18, %c0_19] : memref<1x1x8x2xf32, #tpu.memory_space<vmem>>, vector<1x1x8x2xf32>
    %25 = vector.shape_cast %24 : vector<1x1x8x2xf32> to vector<8x2xf32>
    %26 = vector.shape_cast %23 : vector<8x2xf32> to vector<1x1x8x2xf32>
    tpu.vector_store %arg7[%c0_16, %c0_17, %c0_18, %c0_19], %26 {strides = array<i32>} : memref<1x1x8x2xf32, #tpu.memory_space<vmem>>, vector<1x1x8x2xf32>,
    return
  }
  func.func @transform_0(%arg0: i32, %arg1: i32) -> (i32, i32, i32) {
    %c0_i32 = arith.constant 0 : i32
    %c0_i32_0 = arith.constant 0 : i32
    return %arg0, %c0_i32, %arg1 : i32, i32, i32
  }
  func.func @transform_1(%arg0: i32, %arg1: i32) -> (i32, i32, i32, i32) {
    %c0_i32 = arith.constant 0 : i32
    %c0_i32_0 = arith.constant 0 : i32
    %c0_i32_1 = arith.constant 0 : i32
    return %arg0, %arg1, %c0_i32, %c0_i32_0 : i32, i32, i32, i32
  }
  func.func @transform_2(%arg0: i32, %arg1: i32) -> (i32, i32) {
    %c0_i32 = arith.constant 0 : i32
    %c0_i32_0 = arith.constant 0 : i32
    %c0_i32_1 = arith.constant 0 : i32
    return %c0_i32, %c0_i32_0 : i32, i32
  }
  func.func @transform_3(%arg0: i32, %arg1: i32) -> (i32, i32) {
    %c0_i32 = arith.constant 0 : i32
    %c0_i32_0 = arith.constant 0 : i32
    %c0_i32_1 = arith.constant 0 : i32
    return %c0_i32, %c0_i32_0 : i32, i32
  }
  func.func @transform_4(%arg0: i32, %arg1: i32) -> (i32, i32) {
    %c0_i32 = arith.constant 0 : i32
    %c0_i32_0 = arith.constant 0 : i32
    %c0_i32_1 = arith.constant 0 : i32
    return %c0_i32, %c0_i32_0 : i32, i32
  }
  func.func @transform_5(%arg0: i32, %arg1: i32) -> (i32, i32, i32, i32) {
    %c0_i32 = arith.constant 0 : i32
    %c0_i32_0 = arith.constant 0 : i32
    %c0_i32_1 = arith.constant 0 : i32
    return %arg0, %arg1, %c0_i32, %c0_i32_0 : i32, i32, i32, i32
  }
}

</mosaic_0001>

<llo_original>
// kernel: tpu_custom_call.1
$region0: #{tpu_custom_call.1}
  #allocation0 [shape = 'u32[]', space=smem, size = 0x4, offset = 0x4, fixed_abs, tag = 'smem constant byte address 0x4 - core index']
  #allocation1 [shape = 'u32[72,128]{1,0:T(1,128)}', space=vmem, size = 0x9000, scoped, tag = 'internal scratch']
  %s0 = inlined_call_operand.vmem [shape: f32[2,4,16], index: 0, kind: input, shape index: {}]
  %s1 = inlined_call_operand.vmem [shape: f32[2,1,4,2], index: 1, kind: input, shape index: {}]
  %s2 = inlined_call_operand.vmem [shape: f32[8,4], index: 2, kind: input, shape index: {}]
  %s3 = inlined_call_operand.vmem [shape: f32[8,4], index: 3, kind: input, shape index: {}]
  %s4 = inlined_call_operand.vmem [shape: f32[8,4], index: 4, kind: input, shape index: {}]
  %s5 = inlined_call_operand.vmem [shape: f32[2,1,8,2], index: 5, kind: output, shape index: {}]
  %s6 = sld [smem:[#allocation0]]
  $region53: #{tpu_custom_call.1} parent=0
    _
  %s8 = ssub.s32 1, %s6
  %s9 = scalar_select 0, %s8, %s6
  loop: start=0, step=1, limit=4
  $region2: #{tpu_custom_call.1} parent=0 // loop_pre_header
    _
  $region3: #{tpu_custom_call.1} parent=0 // loop_header
    %s11 = sphi 0, %s15
    %p12 = scmp.ge.s32.totalorder %s11, 4
    %s18 = sphi 0, %s30
    %s19 = sphi 0, %s26
    %s20 = sphi 0, %s18
    %s21 = sphi 0, %s19
    %s22 = sphi 0, %s20
    %s23 = sphi 0, %s21
    %s35 = sphi 0, %s37
    %s38 = sphi 0, %s35
    %s39 = sphi 0, %s38
    %s55 = sphi 0, %s39
    %s63 = sphi 0, %s65
    %s66 = sphi 0, %s63
    %s67 = sphi 0, %s66
    %s83 = sphi 0, %s67
    %s87 = sphi 0, %s87
    %s89 = sphi 0, %s87
    %s90 = sphi 0, %s89
    %s104 = sphi 0, %s90
    %s108 = sphi 0, %s108
    %s110 = sphi 0, %s108
    %s111 = sphi 0, %s110
    %s125 = sphi 0, %s111
    %s129 = sphi 0, %s129
    %s131 = sphi 0, %s129
    %s132 = sphi 0, %s131
    %s146 = sphi 0, %s132
    %s154 = sphi 0, %s156
    %s157 = sphi 0, %s154
    %s158 = sphi 0, %s157
    %s174 = sphi 0, %s158
  $region4: #{tpu_custom_call.1} parent=0 // loop_header_branch
    %14 = sbr.rel (%p12) target = $region8
  $region5: #{tpu_custom_call.1} parent=0 // loop_body
    %s16 = ssub.s32 %s11, 1
    %s17 = ssub.s32 %s11, 2
    %s24 = sadd.s32 1, %s19
    %p25 = scmp.ge.s32.totalorder %s24, 1
    %s26 = scalar_select %p25, 0, %s24
    %s27 = sadd.s32 1, %s18
    %s28 = scalar_select %p25, %s27, %s18
    %p29 = scmp.ge.s32.totalorder %s28, 2
    %s30 = scalar_select %p29, 0, %s28
    %s31 = ssub.s32 %s18, %s30
    %s32 = ssub.s32 %s19, %s26
    %s33 = sor.u32 %s31, %s32
    %p34 = scmp.eq.s32.totalorder %s33, 0
    %s36 = sadd.s32 %s35, 1
    %s37 = scalar_select %p34, %s35, %s36
    %p40 = pneg %p34
    %p41 = scmp.eq.s32.totalorder %s11, 1
    %p42 = por %p40, %p41
    %p43 = scmp.ne.s32.totalorder %s35, %s38
    %p44 = scmp.eq.s32.totalorder %s11, 0
    %p45 = por %p43, %p44
    %p46 = scmp.ne.s32.totalorder %s35, %s38
    %p47 = scmp.eq.s32.totalorder %s16, 1
    %p48 = por %p46, %p47
    %p49 = scmp.ne.s32.totalorder %s38, %s39
    %p50 = scmp.eq.s32.totalorder %s16, 0
    %p51 = por %p49, %p50
    %p52 = scmp.ne.s32.totalorder %s38, %s39
    %p53 = scmp.eq.s32.totalorder %s17, 1
    %p54 = por %p52, %p53
    %p56 = scmp.ne.s32.totalorder %s39, %s55
    %p57 = scmp.eq.s32.totalorder %s17, 0
    %p58 = por %p56, %p57
    %s59 = ssub.s32 %s18, %s30
    %s60 = ssub.s32 %s19, %s26
    %s61 = sor.u32 %s59, %s60
    %p62 = scmp.eq.s32.totalorder %s61, 0
    %s64 = sadd.s32 %s63, 1
    %s65 = scalar_select %p62, %s63, %s64
    %p68 = pneg %p62
    %p69 = scmp.eq.s32.totalorder %s11, 1
    %p70 = por %p68, %p69
    %p71 = scmp.ne.s32.totalorder %s63, %s66
    %p72 = scmp.eq.s32.totalorder %s11, 0
    %p73 = por %p71, %p72
    %p74 = scmp.ne.s32.totalorder %s63, %s66
    %p75 = scmp.eq.s32.totalorder %s16, 1
    %p76 = por %p74, %p75
    %p77 = scmp.ne.s32.totalorder %s66, %s67
    %p78 = scmp.eq.s32.totalorder %s16, 0
    %p79 = por %p77, %p78
    %p80 = scmp.ne.s32.totalorder %s66, %s67
    %p81 = scmp.eq.s32.totalorder %s17, 1
    %p82 = por %p80, %p81
    %p84 = scmp.ne.s32.totalorder %s67, %s83
    %p85 = scmp.eq.s32.totalorder %s17, 0
    %p86 = por %p84, %p85
    %s88 = sadd.s32 %s87, 1
    %p91 = scmp.eq.s32.totalorder %s11, 1
    %p92 = scmp.ne.s32.totalorder %s87, %s89
    %p93 = scmp.eq.s32.totalorder %s11, 0
    %p94 = por %p92, %p93
    %p95 = scmp.ne.s32.totalorder %s87, %s89
    %p96 = scmp.eq.s32.totalorder %s16, 1
    %p97 = por %p95, %p96
    %p98 = scmp.ne.s32.totalorder %s89, %s90
    %p99 = scmp.eq.s32.totalorder %s16, 0
    %p100 = por %p98, %p99
    %p101 = scmp.ne.s32.totalorder %s89, %s90
    %p102 = scmp.eq.s32.totalorder %s17, 1
    %p103 = por %p101, %p102
    %p105 = scmp.ne.s32.totalorder %s90, %s104
    %p106 = scmp.eq.s32.totalorder %s17, 0
    %p107 = por %p105, %p106
    %s109 = sadd.s32 %s108, 1
    %p112 = scmp.eq.s32.totalorder %s11, 1
    %p113 = scmp.ne.s32.totalorder %s108, %s110
    %p114 = scmp.eq.s32.totalorder %s11, 0
    %p115 = por %p113, %p114
    %p116 = scmp.ne.s32.totalorder %s108, %s110
    %p117 = scmp.eq.s32.totalorder %s16, 1
    %p118 = por %p116, %p117
    %p119 = scmp.ne.s32.totalorder %s110, %s111
    %p120 = scmp.eq.s32.totalorder %s16, 0
    %p121 = por %p119, %p120
    %p122 = scmp.ne.s32.totalorder %s110, %s111
    %p123 = scmp.eq.s32.totalorder %s17, 1
    %p124 = por %p122, %p123
    %p126 = scmp.ne.s32.totalorder %s111, %s125
    %p127 = scmp.eq.s32.totalorder %s17, 0
    %p128 = por %p126, %p127
    %s130 = sadd.s32 %s129, 1
    %p133 = scmp.eq.s32.totalorder %s11, 1
    %p134 = scmp.ne.s32.totalorder %s129, %s131
    %p135 = scmp.eq.s32.totalorder %s11, 0
    %p136 = por %p134, %p135
    %p137 = scmp.ne.s32.totalorder %s129, %s131
    %p138 = scmp.eq.s32.totalorder %s16, 1
    %p139 = por %p137, %p138
    %p140 = scmp.ne.s32.totalorder %s131, %s132
    %p141 = scmp.eq.s32.totalorder %s16, 0
    %p142 = por %p140, %p141
    %p143 = scmp.ne.s32.totalorder %s131, %s132
    %p144 = scmp.eq.s32.totalorder %s17, 1
    %p145 = por %p143, %p144
    %p147 = scmp.ne.s32.totalorder %s132, %s146
    %p148 = scmp.eq.s32.totalorder %s17, 0
    %p149 = por %p147, %p148
    %s150 = ssub.s32 %s18, %s30
    %s151 = ssub.s32 %s19, %s26
    %s152 = sor.u32 %s150, %s151
    %p153 = scmp.eq.s32.totalorder %s152, 0
    %s155 = sadd.s32 %s154, 1
    %s156 = scalar_select %p153, %s154, %s155
    %p159 = pneg %p153
    %p160 = scmp.eq.s32.totalorder %s11, 1
    %p161 = por %p159, %p160
    %p162 = scmp.ne.s32.totalorder %s154, %s157
    %p163 = scmp.eq.s32.totalorder %s11, 0
    %p164 = por %p162, %p163
    %p165 = scmp.ne.s32.totalorder %s154, %s157
    %p166 = scmp.eq.s32.totalorder %s16, 1
    %p167 = por %p165, %p166
    %p168 = scmp.ne.s32.totalorder %s157, %s158
    %p169 = scmp.eq.s32.totalorder %s16, 0
    %p170 = por %p168, %p169
    %p171 = scmp.ne.s32.totalorder %s157, %s158
    %p172 = scmp.eq.s32.totalorder %s17, 1
    %p173 = por %p171, %p172
    %p175 = scmp.ne.s32.totalorder %s158, %s174
    %p176 = scmp.eq.s32.totalorder %s17, 0
    %p177 = por %p175, %p176
    %p178 = scmp.le.s32.totalorder 1, %s11
    %p179 = scmp.lt.s32.totalorder %s11, 3
    %p180 = pnand %p178, %p179
    %p181 = pneg %p180
    // Predicated region
    $region9: #{tpu_custom_call.1} parent=5 // pred_check
      _
    $region10: #{tpu_custom_call.1} parent=5 // pred_check_branch
      %183 = sbr.rel (%p180) target = $region12
    $region11: #{tpu_custom_call.1} parent=5 // pred_region
      %s184 = ssub.s32 %s11, 1
      // Predicated region
      $region13: #{tpu_custom_call.1} parent=11 // pred_check
        %p185 = pneg %p100
      $region14: #{tpu_custom_call.1} parent=11 // pred_check_branch
        %187 = sbr.rel (%p185) target = $region16
      $region15: #{tpu_custom_call.1} parent=11 // pred_region
        _
      $region16: #{tpu_custom_call.1} parent=11 // pred_fallthru
        _
      // Predicated region
      $region17: #{tpu_custom_call.1} parent=11 // pred_check
        %p188 = pneg %p121
      $region18: #{tpu_custom_call.1} parent=11 // pred_check_branch
        %190 = sbr.rel (%p188) target = $region20
      $region19: #{tpu_custom_call.1} parent=11 // pred_region
        _
      $region20: #{tpu_custom_call.1} parent=11 // pred_fallthru
        _
      // Predicated region
      $region21: #{tpu_custom_call.1} parent=11 // pred_check
        %p191 = pneg %p142
      $region22: #{tpu_custom_call.1} parent=11 // pred_check_branch
        %193 = sbr.rel (%p191) target = $region24
      $region23: #{tpu_custom_call.1} parent=11 // pred_region
        _
      $region24: #{tpu_custom_call.1} parent=11 // pred_fallthru
        _
    $region12: #{tpu_custom_call.1} parent=5 // pred_fallthru
      _
    %p194 = scmp.lt.s32.totalorder %s11, 2
    // Predicated region
    $region25: #{tpu_custom_call.1} parent=5 // pred_check
      %p195 = pneg %p194
    $region26: #{tpu_custom_call.1} parent=5 // pred_check_branch
      %197 = sbr.rel (%p195) target = $region28
    $region27: #{tpu_custom_call.1} parent=5 // pred_region
      // Predicated region
      $region29: #{tpu_custom_call.1} parent=27 // pred_check
        %p198 = pneg %p45
      $region30: #{tpu_custom_call.1} parent=27 // pred_check_branch
        %200 = sbr.rel (%p198) target = $region32
      $region31: #{tpu_custom_call.1} parent=27 // pred_region
        %p201 = scmp.lt.s32.totalorder %s18, 1
        %s202 = scalar_select %p201, %s18, 1
        %p203 = scmp.lt.s32.totalorder %s19, 0
        %s204 = scalar_select %p203, %s19, 0
        %s205 = sadd.s32 %s204, %s202
        %s206 = smul.addr %s205, 4
        %s207 = scalar_lea.vmem %s0, %s206
      $region32: #{tpu_custom_call.1} parent=27 // pred_fallthru
        _
      // Predicated region
      $region33: #{tpu_custom_call.1} parent=27 // pred_check
        %p208 = pneg %p73
      $region34: #{tpu_custom_call.1} parent=27 // pred_check_branch
        %210 = sbr.rel (%p208) target = $region36
      $region35: #{tpu_custom_call.1} parent=27 // pred_region
        %p211 = scmp.lt.s32.totalorder %s18, 1
        %s212 = scalar_select %p211, %s18, 1
        %p213 = scmp.lt.s32.totalorder %s19, 0
        %s214 = scalar_select %p213, %s19, 0
        %s215 = sadd.s32 %s214, %s212
        %s216 = smul.addr %s215, 4
        %s217 = scalar_lea.vmem %s1, %s216
      $region36: #{tpu_custom_call.1} parent=27 // pred_fallthru
        _
    $region28: #{tpu_custom_call.1} parent=5 // pred_fallthru
      _
    %p218 = scmp.le.s32.totalorder 1, %s11
    %p219 = scmp.lt.s32.totalorder %s11, 3
    %p220 = pnand %p218, %p219
    %p221 = pneg %p220
    // Predicated region
    $region37: #{tpu_custom_call.1} parent=5 // pred_check
      _
    $region38: #{tpu_custom_call.1} parent=5 // pred_check_branch
      %223 = sbr.rel (%p220) target = $region40
    $region39: #{tpu_custom_call.1} parent=5 // pred_region
      %s224 = ssub.s32 %s11, 1
      %p225 = scmp.lt.s32.totalorder %s20, 1
      %s226 = scalar_select %p225, %s20, 1
      %p227 = scmp.lt.s32.totalorder %s21, 0
      %s228 = scalar_select %p227, %s21, 0
      %s229 = sadd.s32 %s228, %s226
      %s230 = smul.addr %s229, 4
      %s231 = scalar_lea.vmem %s0, %s230
      %p232 = pneg %p51
      %p233 = pneg %p48
      %p234 = scmp.lt.s32.totalorder %s20, 1
      %s235 = scalar_select %p234, %s20, 1
      %p236 = scmp.lt.s32.totalorder %s21, 0
      %s237 = scalar_select %p236, %s21, 0
      %s238 = sadd.s32 %s237, %s235
      %s239 = smul.addr %s238, 4
      %s240 = scalar_lea.vmem %s1, %s239
      %p241 = pneg %p79
      %p242 = pneg %p76
      %p243 = pneg %p100
      %p244 = pneg %p97
      %p245 = pneg %p121
      %p246 = pneg %p118
      %p247 = pneg %p142
      %p248 = pneg %p139
      %p249 = pneg %p170
      %p250 = pneg %p167
      %p251 = scmp.lt.s32.totalorder %s20, 1
      %s252 = scalar_select %p251, %s20, 1
      %p253 = scmp.lt.s32.totalorder %s21, 0
      %s254 = scalar_select %p253, %s21, 0
      %s255 = sadd.s32 %s254, %s252
      %s256 = smul.addr %s255, 8
      %s257 = scalar_lea.vmem %s5, %s256
      %p258 = scmp.lt.s32.totalorder %s20, 1
      %s259 = scalar_select %p258, %s20, 1
      %p260 = scmp.lt.s32.totalorder %s21, 0
      %s261 = scalar_select %p260, %s21, 0
      %s262 = sadd.s32 %s261, %s259
      %s263 = smul.addr %s262, 4
      %s264 = scalar_lea.vmem %s0, %s263
      %p265 = scmp.lt.s32.totalorder %s20, 1
      %s266 = scalar_select %p265, %s20, 1
      %p267 = scmp.lt.s32.totalorder %s21, 0
      %s268 = scalar_select %p267, %s21, 0
      %s269 = sadd.s32 %s268, %s266
      %s270 = smul.addr %s269, 4
      %s271 = scalar_lea.vmem %s1, %s270
      %p272 = scmp.lt.s32.totalorder %s20, 1
      %s273 = scalar_select %p272, %s20, 1
      %p274 = scmp.lt.s32.totalorder %s21, 0
      %s275 = scalar_select %p274, %s21, 0
      %s276 = sadd.s32 %s275, %s273
      %s277 = smul.addr %s276, 8
      %s278 = scalar_lea.vmem %s5, %s277
      %v279 = vld [vmem:[%s264] sm:$0xf]
      %v280 = vld [vmem:[%s271] sm:$0xf]
      %282 = vrot.lane.b32.xlu0 %v279, 1
      %v283 = vpop.permute.xlu0 %282
      %vm285 = vcmask 7168
      %v286 = vsel %vm285, %v280, %v283
      %287 = vrot.lane.b32.xlu0 %v279, 127
      %v288 = vpop.permute.xlu0 %287
      %291 = vrot.lane.b32.xlu0 %v280, 14
      %v292 = vpop.permute.xlu0 %291
      %vm294 = vcmask 121856
      %v295 = vsel %vm294, %v288, %v292
      %v296 = vld [vmem:[%s2] sm:$0xff]
      %v297 = vld [vmem:[%s3] sm:$0xff]
      %vm298 = vcmask 31744
      %v300 = vsel %vm298, %v297, 0
      %vm302 = vcmask 1043456
      %v303 = vsel %vm302, %v279, 0
      %305 = vmatpush.msra.mxu0 0.0
      %306 = vmatpush.msra.mxu0 0.0
      %307 = vmatpush.msra.mxu0 0.0
      %308 = vmatpush.msra.mxu0 0.0
      %309 = vmatpush.msra.mxu0 0.0
      %310 = vmatpush.msra.mxu0 0.0
      %311 = vmatpush.msra.mxu0 0.0
      %312 = vmatpush.msra.mxu0 0.0
      %313 = vmatpush.msra.mxu0 0.0
      %314 = vmatpush.msra.mxu0 0.0
      %315 = vmatpush.msra.mxu0 0.0
      %316 = vmatpush.msra.mxu0 0.0
      %317 = vmatpush.msra.mxu0 0.0
      %318 = vmatpush.msra.mxu0 0.0
      %319 = vmatpush.msra.mxu0 0.0
      %320 = vmatpush.msra.mxu0 %v303
      %321 = vmatmul.f32.gmra.mxu0 %v300
      %v322 = vpop.f32.mrf.mxu0
      %v323 = vadd.f32 0.0, %v322
      %324 = vdwg.mxu0
      %v326 = vsel %vm298, %v296, 0
      %v329 = vsel %vm302, %v286, 0
      %331 = vmatpush.msra.mxu0 0.0
      %332 = vmatpush.msra.mxu0 0.0
      %333 = vmatpush.msra.mxu0 0.0
      %334 = vmatpush.msra.mxu0 0.0
      %335 = vmatpush.msra.mxu0 0.0
      %336 = vmatpush.msra.mxu0 0.0
      %337 = vmatpush.msra.mxu0 0.0
      %338 = vmatpush.msra.mxu0 0.0
      %339 = vmatpush.msra.mxu0 0.0
      %340 = vmatpush.msra.mxu0 0.0
      %341 = vmatpush.msra.mxu0 0.0
      %342 = vmatpush.msra.mxu0 0.0
      %343 = vmatpush.msra.mxu0 0.0
      %344 = vmatpush.msra.mxu0 0.0
      %345 = vmatpush.msra.mxu0 0.0
      %346 = vmatpush.msra.mxu0 %v329
      %347 = vmatmul.f32.gmra.mxu0 %v326
      %v348 = vpop.f32.mrf.mxu0
      %v349 = vadd.f32 %v323, %v348
      %350 = vdwg.mxu0
      %v351 = vld [vmem:[%s4] sm:$0xff]
      %v353 = vsel %vm298, %v351, 0
      %v356 = vsel %vm302, %v295, 0
      %358 = vmatpush.msra.mxu0 0.0
      %359 = vmatpush.msra.mxu0 0.0
      %360 = vmatpush.msra.mxu0 0.0
      %361 = vmatpush.msra.mxu0 0.0
      %362 = vmatpush.msra.mxu0 0.0
      %363 = vmatpush.msra.mxu0 0.0
      %364 = vmatpush.msra.mxu0 0.0
      %365 = vmatpush.msra.mxu0 0.0
      %366 = vmatpush.msra.mxu0 0.0
      %367 = vmatpush.msra.mxu0 0.0
      %368 = vmatpush.msra.mxu0 0.0
      %369 = vmatpush.msra.mxu0 0.0
      %370 = vmatpush.msra.mxu0 0.0
      %371 = vmatpush.msra.mxu0 0.0
      %372 = vmatpush.msra.mxu0 0.0
      %373 = vmatpush.msra.mxu0 %v356
      %374 = vmatmul.f32.gmra.mxu0 %v353
      %v375 = vpop.f32.mrf.mxu0
      %v376 = vadd.f32 0.0, %v375
      %377 = vdwg.mxu0
      %v378 = vadd.f32 %v349, %v376
      %vm379 = vcmask 130048
      %v380 = vsel %vm379, %v378, 0.0
      %381 = vadd.xlane.f32.xlu0 %v380
      %v382 = vpop.xlane.xlu0 %381
      %v383 = vmul.f32 %v378, %v378
      %v384 = vsel %vm379, %v383, 0.0
      %385 = vadd.xlane.f32.xlu0 %v384
      %v386 = vpop.xlane.xlu0 %385
      %v387 = vsel %vm285, %v382, %v386
      %vm388 = vcmask 15360
      %389 = vst.msk [vmem:[%s278] sm:$0xff] %vm388, %v387
      %p390 = scmp.lt.s32.totalorder %s20, 1
      %s391 = scalar_select %p390, %s20, 1
      %p392 = scmp.lt.s32.totalorder %s21, 0
      %s393 = scalar_select %p392, %s21, 0
      %s394 = sadd.s32 %s393, %s391
      %s395 = smul.addr %s394, 8
      %s396 = scalar_lea.vmem %s5, %s395
      // Predicated region
      $region41: #{tpu_custom_call.1} parent=39 // pred_check
        %p397 = pneg %p167
      $region42: #{tpu_custom_call.1} parent=39 // pred_check_branch
        %399 = sbr.rel (%p397) target = $region44
      $region43: #{tpu_custom_call.1} parent=39 // pred_region
        _
      $region44: #{tpu_custom_call.1} parent=39 // pred_fallthru
        _
    $region40: #{tpu_custom_call.1} parent=5 // pred_fallthru
      _
    %p400 = scmp.le.s32.totalorder 2, %s11
    // Predicated region
    $region45: #{tpu_custom_call.1} parent=5 // pred_check
      %p401 = pneg %p400
    $region46: #{tpu_custom_call.1} parent=5 // pred_check_branch
      %403 = sbr.rel (%p401) target = $region48
    $region47: #{tpu_custom_call.1} parent=5 // pred_region
      %s404 = ssub.s32 %s11, 2
      // Predicated region
      $region49: #{tpu_custom_call.1} parent=47 // pred_check
        %p405 = pneg %p173
      $region50: #{tpu_custom_call.1} parent=47 // pred_check_branch
        %407 = sbr.rel (%p405) target = $region52
      $region51: #{tpu_custom_call.1} parent=47 // pred_region
        %p408 = scmp.lt.s32.totalorder %s22, 1
        %s409 = scalar_select %p408, %s22, 1
        %p410 = scmp.lt.s32.totalorder %s23, 0
        %s411 = scalar_select %p410, %s23, 0
        %s412 = sadd.s32 %s411, %s409
        %s413 = smul.addr %s412, 8
        %s414 = scalar_lea.vmem %s5, %s413
      $region52: #{tpu_custom_call.1} parent=47 // pred_fallthru
        _
    $region48: #{tpu_custom_call.1} parent=5 // pred_fallthru
      _
  $region6: #{tpu_custom_call.1} parent=0 // loop_footer
    %s15 = sadd.s32 1, %s11
  $region7: #{tpu_custom_call.1} parent=0 // loop_footer_branch
    %10 = sbr.rel target = $region3
  $region8: #{tpu_custom_call.1} parent=0 // loop_exit
    _

</llo_original>
